<compile_context>
chip_gen: v6e
topology: v6e:2x2x1
jax: 0.10.0
libtpu: 0.0.40
codegen_flags: <defaults>
</compile_context>

<pallas_src>
import numpy as np
import jax
import jax.numpy as jnp
from jax.experimental import pallas as pl
from jax.experimental.pallas import tpu as pltpu


# -------------------- MADE mask construction (glue, plain numpy) --------------------

def make_degrees(in_size, hidden_sizes, input_order="reverse"):
    if input_order == "reverse":
        deg_in = np.arange(in_size, 0, -1)
    else:
        deg_in = np.arange(1, in_size + 1)
    degrees = [deg_in]
    for h in hidden_sizes:
        deg_h = np.arange(h) % max(1, in_size - 1) + min(1, in_size - 1)
        degrees.append(deg_h)
    return degrees


def make_masks(degrees, out_size_multiplier=2):
    """Masks stored as [fan_in, fan_out] to match the W layout used below."""
    masks = []
    for d_prev, d_next in zip(degrees[:-1], degrees[1:]):
        masks.append((d_prev[:, None] <= d_next[None, :]).astype(np.float32))
    m_out = (degrees[-1][:, None] < degrees[0][None, :]).astype(np.float32)
    m_out = np.tile(m_out, (1, out_size_multiplier))
    return masks, m_out


# ---------------- Pallas kernel: masked MLP + Gaussian head -----------------
# HBM blocks are natural layout [TB, D]; the batch<->lane flip is done in-kernel.

def gaussian_made_kernel(x_ref, w1t_ref, b1t_ref, w2t_ref, b2t_ref,
                         wot_ref, bot_ref, u_ref, ld_ref):
    d = x_ref.shape[1]

    xt = x_ref[...].T                                    # [D, TB] f32 (XLU transpose)
    xt_bf = xt.astype(jnp.bfloat16)                      # MXU operand

    # h1 = relu(W1^T @ x^T + b1) -> [H1, TB]   (bf16 MXU operands, f32 accumulate)
    h = jnp.dot(w1t_ref[...], xt_bf, preferred_element_type=jnp.float32)
    h = jnp.maximum(h + b1t_ref[...], 0.0)

    # h2 = relu(W2^T @ h1 + b2) -> [H2, TB]
    h = jnp.dot(w2t_ref[...], h.astype(jnp.bfloat16), preferred_element_type=jnp.float32)
    h = jnp.maximum(h + b2t_ref[...], 0.0)

    # Merged output head -> [2D, TB]; mu / log_sigma_sq are free sublane slices
    # at offsets 0 / D (D is a multiple of 8 here).
    out = jnp.dot(wot_ref[...], h.astype(jnp.bfloat16), preferred_element_type=jnp.float32)
    out = out + bot_ref[...]
    mu_t = out[:d, :]                                    # [D, TB]
    neg_half_ls = -0.5 * out[d:, :]                      # [D, TB]

    # Gaussian head epilogue in f32, batch-on-lane (dense vregs for exp / mul / sum).
    u_t = (xt - mu_t) * jnp.exp(neg_half_ls)             # [D, TB]
    u_ref[...] = u_t.T                                   # [TB, D] natural-layout write
    ld_ref[...] = jnp.sum(neg_half_ls, axis=0, keepdims=True)   # [1, TB]


# -------------------- Wrapper: generation-aware tiling + pallas_call --------------------

def _vmem_capacity_bytes():
    """Per-core VMEM capacity; falls back to v7x's 64 MiB (smallest recent gen)."""
    try:
        return int(pltpu.get_tpu_info().vmem_capacity_bytes)
    except Exception:
        return 64 * 1024 * 1024


def _choose_tile_batch(batch, vmem_budget_bytes):
    """Largest 128-aligned batch tile that fits the VMEM budget, capped so the
    'parallel' batch axis keeps >=2 grid steps whenever the batch allows it
    (keeps both v7x TensorCores busy; harmless on single-TC v5e/v6e)."""
    # Approx. per-row VMEM: double-buffered lane-padded x/u blocks (~2 KiB/row)
    # plus transposed in-kernel temporaries (~1.5 KiB/row).
    per_row_bytes = 3584
    tb = (vmem_budget_bytes // per_row_bytes) // 128 * 128
    tb = max(128, min(8192, tb))
    half = (batch // 2) // 128 * 128
    if half >= 128:
        tb = min(tb, half)        # guarantees >=2 grid steps
    else:
        tb = 128                  # tiny batches: a single 128-row tile
    return tb


def gaussian_made_forward(x, params):
    """x: [B, D] f32.  Returns (log_det [B], u [B, D]) like the PyTorch module."""
    w1, b1, w2, b2, wo, bo = params
    B, D = x.shape
    H1 = w1.shape[1]
    H2 = w2.shape[1]

    vmem_cap = _vmem_capacity_bytes()
    vmem_limit = min(vmem_cap * 3 // 4, 112 * 1024 * 1024)
    TB = _choose_tile_batch(B, vmem_limit // 2)

    bf16 = jnp.bfloat16
    # Weight-only transposes/casts: KB-scale, negligible HBM traffic.
    # Autoregressive masks were applied in f32 (init); cast to bf16 only after masking.
    w1t = w1.T.astype(bf16)                           # [H1, D]
    w2t = w2.T.astype(bf16)                           # [H2, H1]
    wot = wo.T.astype(bf16)                           # [2D, H2]  (merged mu/log_sigma head)
    b1t = b1.reshape(H1, 1).astype(jnp.float32)
    b2t = b2.reshape(H2, 1).astype(jnp.float32)
    bot = bo.reshape(2 * D, 1).astype(jnp.float32)

    # Ragged batches are handled by partial edge blocks in the grid; only batches
    # smaller than a single tile get padded (a few KB at most).
    Bq = max(B, TB)
    x_in = x if Bq == B else jnp.pad(x, ((0, Bq - B), (0, 0)))
    grid = (pl.cdiv(Bq, TB),)

    flops = 2 * Bq * (D * H1 + H1 * H2 + H2 * 2 * D)
    bytes_accessed = (4 * Bq * D * 2 + 4 * Bq
                      + 2 * (D * H1 + H1 * H2 + 2 * D * H2)
                      + 4 * (H1 + H2 + 2 * D))

    u, ld = pl.pallas_call(
        gaussian_made_kernel,
        out_shape=(
            jax.ShapeDtypeStruct((Bq, D), jnp.float32),    # u  (natural layout)
            jax.ShapeDtypeStruct((1, Bq), jnp.float32),    # log_det row
        ),
        grid=grid,
        in_specs=[
            pl.BlockSpec((TB, D), lambda i: (i, 0)),       # x (streamed, natural layout)
            pl.BlockSpec((H1, D), lambda i: (0, 0)),       # W1^T   (VMEM-resident)
            pl.BlockSpec((H1, 1), lambda i: (0, 0)),       # b1^T
            pl.BlockSpec((H2, H1), lambda i: (0, 0)),      # W2^T
            pl.BlockSpec((H2, 1), lambda i: (0, 0)),       # b2^T
            pl.BlockSpec((2 * D, H2), lambda i: (0, 0)),   # Wo^T (merged head)
            pl.BlockSpec((2 * D, 1), lambda i: (0, 0)),    # bo^T
        ],
        out_specs=(
            pl.BlockSpec((TB, D), lambda i: (i, 0)),       # u
            pl.BlockSpec((1, TB), lambda i: (0, i)),       # log_det
        ),
        compiler_params=pltpu.CompilerParams(
            dimension_semantics=("parallel",),             # megacore / dual-TC sharding
            vmem_limit_bytes=vmem_limit,
        ),
        cost_estimate=pl.CostEstimate(
            flops=flops, transcendentals=Bq * D, bytes_accessed=bytes_accessed),
    )(x_in, w1t, b1t, w2t, b2t, wot, bot)

    if Bq != B:
        u = u[:B]
        ld = ld[:, :B]
    return ld.reshape(B), u


# -------------------- Deterministic parameter setup (glue) --------------------

def init_params(key, in_size, hidden_sizes):
    degrees = make_degrees(in_size, hidden_sizes, input_order="reverse")
    masks, m_out = make_masks(degrees, out_size_multiplier=2)

    sizes = [in_size] + list(hidden_sizes)
    keys = jax.random.split(key, 2 * len(hidden_sizes) + 2)
    params = []
    ki = 0
    for l, (fi, fo) in enumerate(zip(sizes[:-1], sizes[1:])):
        w = jax.random.normal(keys[ki], (fi, fo), jnp.float32) * (1.0 / np.sqrt(fi))
        ki += 1
        b = 0.01 * jax.random.normal(keys[ki], (1, fo), jnp.float32)
        ki += 1
        params.append(w * jnp.asarray(masks[l]))   # autoregressive mask, applied in f32
        params.append(b)
    fo = 2 * in_size
    fi = sizes[-1]
    wo = jax.random.normal(keys[ki], (fi, fo), jnp.float32) * (1.0 / np.sqrt(fi))
    bo = 0.01 * jax.random.normal(keys[ki + 1], (1, fo), jnp.float32)
    params.append(wo * jnp.asarray(m_out))
    params.append(bo)
    return tuple(params)


# -------------------- Pure-JAX reference (same bf16-operand matmul path) --------------------

def reference_forward(x, params):
    w1, b1, w2, b2, wo, bo = params
    D = x.shape[1]
    bf = lambda a: a.astype(jnp.bfloat16).astype(jnp.float32)   # mimic bf16 MXU operands
    h = jnp.maximum(jnp.dot(bf(x), bf(w1)) + b1, 0.0)
    h = jnp.maximum(jnp.dot(bf(h), bf(w2)) + b2, 0.0)
    out = jnp.dot(bf(h), bf(wo)) + bo
    mu, ls = out[:, :D], out[:, D:]
    u = (x - mu) * jnp.exp(-0.5 * ls)
    ld = jnp.sum(-0.5 * ls, axis=1)
    return ld, u


if __name__ == "__main__":
    in_size = 8
    hidden_sizes = [32, 32]
    # 2 full 128-row tiles + one ragged tile: exercises the multi-step "parallel"
    # grid, the >=2-steps tile cap, and the partial edge block (no wrapper pad).
    batch = 272

    key = jax.random.PRNGKey(0)
    kx, kp = jax.random.split(key)
    x = jax.random.normal(kx, (batch, in_size), jnp.float32)
    params = init_params(kp, in_size, hidden_sizes)

    log_det, u = gaussian_made_forward(x, params)
    jax.block_until_ready((log_det, u))

    ld_ref, u_ref = reference_forward(x, params)
    assert u.shape == (batch, in_size) and log_det.shape == (batch,)
    # bf16-operand matmuls => bf16-appropriate tolerance
    np.testing.assert_allclose(np.asarray(u), np.asarray(u_ref), rtol=2e-2, atol=2e-2)
    np.testing.assert_allclose(np.asarray(log_det), np.asarray(ld_ref), rtol=2e-2, atol=2e-2)

    # TODO(synk): GaussianMade.reverse (sequential per-dimension autoregressive
    # sampling) is not implemented here; only forward() was requested.
    print("KERNEL_OK")
</pallas_src>

<mosaic_0001>
module attributes {stable_mosaic.version = 11 : i64} {
  func.func @gaussian_made_kernel(%arg0: i32, %arg1: memref<128x8xf32, #tpu.memory_space<vmem>>, %arg2: memref<32x8xbf16, #tpu.memory_space<vmem>>, %arg3: memref<32x1xf32, #tpu.memory_space<vmem>>, %arg4: memref<32x32xbf16, #tpu.memory_space<vmem>>, %arg5: memref<32x1xf32, #tpu.memory_space<vmem>>, %arg6: memref<16x32xbf16, #tpu.memory_space<vmem>>, %arg7: memref<16x1xf32, #tpu.memory_space<vmem>>, %arg8: memref<128x8xf32, #tpu.memory_space<vmem>>, %arg9: memref<1x128xf32, #tpu.memory_space<vmem>>) attributes {dimension_semantics = [#tpu.dimension_semantics<parallel>], iteration_bounds = array<i64: 3>, scalar_prefetch = 0 : i64, scratch_operands = 0 : i64, tpu.core_type = #tpu.core_type<tc>, window_params = [{transform_indices = @transform_0, window_bounds = array<i64: 128, 8>}, {pipeline_mode = #tpu.pipeline_mode<synchronous>, transform_indices = @transform_1, window_bounds = array<i64: 32, 8>}, {pipeline_mode = #tpu.pipeline_mode<synchronous>, transform_indices = @transform_2, window_bounds = array<i64: 32, 1>}, {pipeline_mode = #tpu.pipeline_mode<synchronous>, transform_indices = @transform_3, window_bounds = array<i64: 32, 32>}, {pipeline_mode = #tpu.pipeline_mode<synchronous>, transform_indices = @transform_4, window_bounds = array<i64: 32, 1>}, {pipeline_mode = #tpu.pipeline_mode<synchronous>, transform_indices = @transform_5, window_bounds = array<i64: 16, 32>}, {pipeline_mode = #tpu.pipeline_mode<synchronous>, transform_indices = @transform_6, window_bounds = array<i64: 16, 1>}, {transform_indices = @transform_7, window_bounds = array<i64: 128, 8>}, {transform_indices = @transform_8, window_bounds = array<i64: 1, 128>}]} {
    %c0 = arith.constant 0 : index
    %c0_0 = arith.constant 0 : index
    %0 = vector.load %arg1[%c0, %c0_0] : memref<128x8xf32, #tpu.memory_space<vmem>>, vector<128x8xf32>
    %1 = tpu.transpose %0, [1, 0] : vector<128x8xf32> -> vector<8x128xf32>
    %2 = arith.truncf %1 : vector<8x128xf32> to vector<8x128xbf16>
    %c0_1 = arith.constant 0 : index
    %c0_2 = arith.constant 0 : index
    %3 = vector.load %arg2[%c0_1, %c0_2] : memref<32x8xbf16, #tpu.memory_space<vmem>>, vector<32x8xbf16>
    %cst = arith.constant dense<0.000000e+00> : vector<32x128xf32>
    %4 = tpu.matmul %3, %2, %cst {dimension_numbers = #tpu.dot_dimension_numbers<[1], [0], [0], [1], [0, 0, 1, 1], [], []>} : vector<32x8xbf16>, vector<8x128xbf16>, vector<32x128xf32> -> vector<32x128xf32>
    %c0_3 = arith.constant 0 : index
    %c0_4 = arith.constant 0 : index
    %5 = vector.load %arg3[%c0_3, %c0_4] : memref<32x1xf32, #tpu.memory_space<vmem>>, vector<32x1xf32>
    %6 = vector.broadcast %5 : vector<32x1xf32> to vector<32x128xf32>
    %7 = arith.addf %4, %6 : vector<32x128xf32>
    %cst_5 = arith.constant 0.000000e+00 : f32
    %8 = vector.broadcast %cst_5 : f32 to vector<32x128xf32>
    %9 = arith.maximumf %7, %8 : vector<32x128xf32>
    %c0_6 = arith.constant 0 : index
    %c0_7 = arith.constant 0 : index
    %10 = vector.load %arg4[%c0_6, %c0_7] : memref<32x32xbf16, #tpu.memory_space<vmem>>, vector<32x32xbf16>
    %11 = arith.truncf %9 : vector<32x128xf32> to vector<32x128xbf16>
    %cst_8 = arith.constant dense<0.000000e+00> : vector<32x128xf32>
    %12 = tpu.matmul %10, %11, %cst_8 {dimension_numbers = #tpu.dot_dimension_numbers<[1], [0], [0], [1], [0, 0, 1, 1], [], []>} : vector<32x32xbf16>, vector<32x128xbf16>, vector<32x128xf32> -> vector<32x128xf32>
    %c0_9 = arith.constant 0 : index
    %c0_10 = arith.constant 0 : index
    %13 = vector.load %arg5[%c0_9, %c0_10] : memref<32x1xf32, #tpu.memory_space<vmem>>, vector<32x1xf32>
    %14 = vector.broadcast %13 : vector<32x1xf32> to vector<32x128xf32>
    %15 = arith.addf %12, %14 : vector<32x128xf32>
    %cst_11 = arith.constant 0.000000e+00 : f32
    %16 = vector.broadcast %cst_11 : f32 to vector<32x128xf32>
    %17 = arith.maximumf %15, %16 : vector<32x128xf32>
    %c0_12 = arith.constant 0 : index
    %c0_13 = arith.constant 0 : index
    %18 = vector.load %arg6[%c0_12, %c0_13] : memref<16x32xbf16, #tpu.memory_space<vmem>>, vector<16x32xbf16>
    %19 = arith.truncf %17 : vector<32x128xf32> to vector<32x128xbf16>
    %cst_14 = arith.constant dense<0.000000e+00> : vector<16x128xf32>
    %20 = tpu.matmul %18, %19, %cst_14 {dimension_numbers = #tpu.dot_dimension_numbers<[1], [0], [0], [1], [0, 0, 1, 1], [], []>} : vector<16x32xbf16>, vector<32x128xbf16>, vector<16x128xf32> -> vector<16x128xf32>
    %c0_15 = arith.constant 0 : index
    %c0_16 = arith.constant 0 : index
    %21 = vector.load %arg7[%c0_15, %c0_16] : memref<16x1xf32, #tpu.memory_space<vmem>>, vector<16x1xf32>
    %22 = vector.broadcast %21 : vector<16x1xf32> to vector<16x128xf32>
    %23 = arith.addf %20, %22 : vector<16x128xf32>
    %24 = vector.extract_strided_slice %23 {offsets = [0, 0], sizes = [8, 128], strides = [1, 1]} : vector<16x128xf32> to vector<8x128xf32>
    %25 = vector.extract_strided_slice %23 {offsets = [8, 0], sizes = [8, 128], strides = [1, 1]} : vector<16x128xf32> to vector<8x128xf32>
    %cst_17 = arith.constant -5.000000e-01 : f32
    %26 = vector.broadcast %cst_17 : f32 to vector<8x128xf32>
    %27 = arith.mulf %26, %25 : vector<8x128xf32>
    %28 = arith.subf %1, %24 : vector<8x128xf32>
    %29 = math.exp %27 : vector<8x128xf32>
    %30 = arith.mulf %28, %29 : vector<8x128xf32>
    %31 = tpu.transpose %30, [1, 0] : vector<8x128xf32> -> vector<128x8xf32>
    %c0_18 = arith.constant 0 : index
    %c0_19 = arith.constant 0 : index
    %32 = vector.load %arg8[%c0_18, %c0_19] : memref<128x8xf32, #tpu.memory_space<vmem>>, vector<128x8xf32>
    tpu.vector_store %arg8[%c0_18, %c0_19], %31 {strides = array<i32>} : memref<128x8xf32, #tpu.memory_space<vmem>>, vector<128x8xf32>,
    %cst_20 = arith.constant dense<0.000000e+00> : vector<128xf32>
    %33 = vector.multi_reduction <add>, %27, %cst_20 [0] : vector<8x128xf32> to vector<128xf32>
    %34 = vector.shape_cast %33 : vector<128xf32> to vector<1x128xf32>
    %c0_21 = arith.constant 0 : index
    %c0_22 = arith.constant 0 : index
    %35 = vector.load %arg9[%c0_21, %c0_22] : memref<1x128xf32, #tpu.memory_space<vmem>>, vector<1x128xf32>
    tpu.vector_store %arg9[%c0_21, %c0_22], %34 {strides = array<i32>} : memref<1x128xf32, #tpu.memory_space<vmem>>, vector<1x128xf32>,
    return
  }
  func.func @transform_0(%arg0: i32) -> (i32, i32) {
    %c0_i32 = arith.constant 0 : i32
    %c0_i32_0 = arith.constant 0 : i32
    return %arg0, %c0_i32 : i32, i32
  }
  func.func @transform_1(%arg0: i32) -> (i32, i32) {
    %c0_i32 = arith.constant 0 : i32
    %c0_i32_0 = arith.constant 0 : i32
    %c0_i32_1 = arith.constant 0 : i32
    return %c0_i32, %c0_i32_0 : i32, i32
  }
  func.func @transform_2(%arg0: i32) -> (i32, i32) {
    %c0_i32 = arith.constant 0 : i32
    %c0_i32_0 = arith.constant 0 : i32
    %c0_i32_1 = arith.constant 0 : i32
    return %c0_i32, %c0_i32_0 : i32, i32
  }
  func.func @transform_3(%arg0: i32) -> (i32, i32) {
    %c0_i32 = arith.constant 0 : i32
    %c0_i32_0 = arith.constant 0 : i32
    %c0_i32_1 = arith.constant 0 : i32
    return %c0_i32, %c0_i32_0 : i32, i32
  }
  func.func @transform_4(%arg0: i32) -> (i32, i32) {
    %c0_i32 = arith.constant 0 : i32
    %c0_i32_0 = arith.constant 0 : i32
    %c0_i32_1 = arith.constant 0 : i32
    return %c0_i32, %c0_i32_0 : i32, i32
  }
  func.func @transform_5(%arg0: i32) -> (i32, i32) {
    %c0_i32 = arith.constant 0 : i32
    %c0_i32_0 = arith.constant 0 : i32
    %c0_i32_1 = arith.constant 0 : i32
    return %c0_i32, %c0_i32_0 : i32, i32
  }
  func.func @transform_6(%arg0: i32) -> (i32, i32) {
    %c0_i32 = arith.constant 0 : i32
    %c0_i32_0 = arith.constant 0 : i32
    %c0_i32_1 = arith.constant 0 : i32
    return %c0_i32, %c0_i32_0 : i32, i32
  }
  func.func @transform_7(%arg0: i32) -> (i32, i32) {
    %c0_i32 = arith.constant 0 : i32
    %c0_i32_0 = arith.constant 0 : i32
    return %arg0, %c0_i32 : i32, i32
  }
  func.func @transform_8(%arg0: i32) -> (i32, i32) {
    %c0_i32 = arith.constant 0 : i32
    %c0_i32_0 = arith.constant 0 : i32
    return %c0_i32, %arg0 : i32, i32
  }
}

</mosaic_0001>

<llo_original>
// kernel: tpu_custom_call.1
$region0: #{tpu_custom_call.1}
  #allocation0 [shape = 'u32[]', space=smem, size = 0x4, offset = 0x4, fixed_abs, tag = 'smem constant byte address 0x4 - core index']
  #allocation1 [shape = 'u32[144,128]{1,0:T(1,128)}', space=vmem, size = 0x12000, scoped, tag = 'internal scratch']
  %s0 = inlined_call_operand.vmem [shape: f32[272,8], index: 0, kind: input, shape index: {}]
  %s1 = inlined_call_operand.vmem [shape: bf16[32,8], index: 1, kind: input, shape index: {}]
  %s2 = inlined_call_operand.vmem [shape: f32[32,1], index: 2, kind: input, shape index: {}]
  %s3 = inlined_call_operand.vmem [shape: bf16[32,32], index: 3, kind: input, shape index: {}]
  %s4 = inlined_call_operand.vmem [shape: f32[32,1], index: 4, kind: input, shape index: {}]
  %s5 = inlined_call_operand.vmem [shape: bf16[16,32], index: 5, kind: input, shape index: {}]
  %s6 = inlined_call_operand.vmem [shape: f32[16,1], index: 6, kind: input, shape index: {}]
  %s7 = inlined_call_operand.vmem [shape: f32[272,8], index: 7, kind: output, shape index: {0}]
  %s8 = inlined_call_operand.hbm [shape: f32[1,272], index: 8, kind: output, shape index: {1}]
  %9 = xla_tuple %s7, %s8
  %s10 = sld [smem:[#allocation0]]
  $region117: #{tpu_custom_call.1} parent=0
    _
  %s12 = ssub.s32 1, %s10
  %s13 = scalar_select 0, %s12, %s10
  $region1: #{tpu_custom_call.1} parent=0
    #allocation2 [shape = 'u8[131072]{0}', space=vmem, size = 0x20000, scoped, tag = 'output window, operand 0']
    #allocation3 [shape = 'u8[1024]{0}', space=vmem, size = 0x400, scoped, tag = 'output window, operand 1']
    #allocation4 [shape = 's32[2]{0}', space=sflag, size = 0x8, scoped, tag = 'scoped memory for tpu_custom_call.1']
    %14 = vsyncpa [#allocation4], 0
    %s15 = scalar_lea.sflag [#allocation4], 1
    %16 = vsyncpa %s15, 0
    loop: start=0, step=1, limit=5
    $region2: #{tpu_custom_call.1} parent=1 // loop_pre_header
      _
    $region3: #{tpu_custom_call.1} parent=1 // loop_header
      %s18 = sphi 0, %s22
      %p19 = scmp.ge.s32.totalorder %s18, 5
      %s28 = sphi 0, %s30
      %s31 = sphi 0, %s28
      %s32 = sphi 0, %s31
      %s48 = sphi 0, %s32
      %s52 = sphi 0, %s52
      %s54 = sphi 0, %s52
      %s55 = sphi 0, %s54
      %s69 = sphi 0, %s55
      %s73 = sphi 0, %s73
      %s75 = sphi 0, %s73
      %s76 = sphi 0, %s75
      %s90 = sphi 0, %s76
      %s94 = sphi 0, %s94
      %s96 = sphi 0, %s94
      %s97 = sphi 0, %s96
      %s111 = sphi 0, %s97
      %s115 = sphi 0, %s115
      %s117 = sphi 0, %s115
      %s118 = sphi 0, %s117
      %s132 = sphi 0, %s118
      %s136 = sphi 0, %s136
      %s138 = sphi 0, %s136
      %s139 = sphi 0, %s138
      %s153 = sphi 0, %s139
      %s157 = sphi 0, %s157
      %s159 = sphi 0, %s157
      %s160 = sphi 0, %s159
      %s174 = sphi 0, %s160
      %s180 = sphi 0, %s182
      %s183 = sphi 0, %s180
      %s184 = sphi 0, %s183
      %s200 = sphi 0, %s184
      %s206 = sphi 0, %s208
      %s209 = sphi 0, %s206
      %s210 = sphi 0, %s209
      %s226 = sphi 0, %s210
    $region4: #{tpu_custom_call.1} parent=1 // loop_header_branch
      %21 = sbr.rel (%p19) target = $region8
    $region5: #{tpu_custom_call.1} parent=1 // loop_body
      %s23 = ssub.s32 %s18, 1
      %s24 = ssub.s32 %s18, 2
      %s25 = sadd.s32 %s18, 1
      %s26 = ssub.s32 %s18, %s25
      %p27 = scmp.eq.s32.totalorder %s26, 0
      %s29 = sadd.s32 %s28, 1
      %s30 = scalar_select %p27, %s28, %s29
      %p33 = pneg %p27
      %p34 = scmp.eq.s32.totalorder %s18, 2
      %p35 = por %p33, %p34
      %p36 = scmp.ne.s32.totalorder %s28, %s31
      %p37 = scmp.eq.s32.totalorder %s18, 0
      %p38 = por %p36, %p37
      %p39 = scmp.ne.s32.totalorder %s28, %s31
      %p40 = scmp.eq.s32.totalorder %s23, 2
      %p41 = por %p39, %p40
      %p42 = scmp.ne.s32.totalorder %s31, %s32
      %p43 = scmp.eq.s32.totalorder %s23, 0
      %p44 = por %p42, %p43
      %p45 = scmp.ne.s32.totalorder %s31, %s32
      %p46 = scmp.eq.s32.totalorder %s24, 2
      %p47 = por %p45, %p46
      %p49 = scmp.ne.s32.totalorder %s32, %s48
      %p50 = scmp.eq.s32.totalorder %s24, 0
      %p51 = por %p49, %p50
      %s53 = sadd.s32 %s52, 1
      %p56 = scmp.eq.s32.totalorder %s18, 2
      %p57 = scmp.ne.s32.totalorder %s52, %s54
      %p58 = scmp.eq.s32.totalorder %s18, 0
      %p59 = por %p57, %p58
      %p60 = scmp.ne.s32.totalorder %s52, %s54
      %p61 = scmp.eq.s32.totalorder %s23, 2
      %p62 = por %p60, %p61
      %p63 = scmp.ne.s32.totalorder %s54, %s55
      %p64 = scmp.eq.s32.totalorder %s23, 0
      %p65 = por %p63, %p64
      %p66 = scmp.ne.s32.totalorder %s54, %s55
      %p67 = scmp.eq.s32.totalorder %s24, 2
      %p68 = por %p66, %p67
      %p70 = scmp.ne.s32.totalorder %s55, %s69
      %p71 = scmp.eq.s32.totalorder %s24, 0
      %p72 = por %p70, %p71
      %s74 = sadd.s32 %s73, 1
      %p77 = scmp.eq.s32.totalorder %s18, 2
      %p78 = scmp.ne.s32.totalorder %s73, %s75
      %p79 = scmp.eq.s32.totalorder %s18, 0
      %p80 = por %p78, %p79
      %p81 = scmp.ne.s32.totalorder %s73, %s75
      %p82 = scmp.eq.s32.totalorder %s23, 2
      %p83 = por %p81, %p82
      %p84 = scmp.ne.s32.totalorder %s75, %s76
      %p85 = scmp.eq.s32.totalorder %s23, 0
      %p86 = por %p84, %p85
      %p87 = scmp.ne.s32.totalorder %s75, %s76
      %p88 = scmp.eq.s32.totalorder %s24, 2
      %p89 = por %p87, %p88
      %p91 = scmp.ne.s32.totalorder %s76, %s90
      %p92 = scmp.eq.s32.totalorder %s24, 0
      %p93 = por %p91, %p92
      %s95 = sadd.s32 %s94, 1
      %p98 = scmp.eq.s32.totalorder %s18, 2
      %p99 = scmp.ne.s32.totalorder %s94, %s96
      %p100 = scmp.eq.s32.totalorder %s18, 0
      %p101 = por %p99, %p100
      %p102 = scmp.ne.s32.totalorder %s94, %s96
      %p103 = scmp.eq.s32.totalorder %s23, 2
      %p104 = por %p102, %p103
      %p105 = scmp.ne.s32.totalorder %s96, %s97
      %p106 = scmp.eq.s32.totalorder %s23, 0
      %p107 = por %p105, %p106
      %p108 = scmp.ne.s32.totalorder %s96, %s97
      %p109 = scmp.eq.s32.totalorder %s24, 2
      %p110 = por %p108, %p109
      %p112 = scmp.ne.s32.totalorder %s97, %s111
      %p113 = scmp.eq.s32.totalorder %s24, 0
      %p114 = por %p112, %p113
      %s116 = sadd.s32 %s115, 1
      %p119 = scmp.eq.s32.totalorder %s18, 2
      %p120 = scmp.ne.s32.totalorder %s115, %s117
      %p121 = scmp.eq.s32.totalorder %s18, 0
      %p122 = por %p120, %p121
      %p123 = scmp.ne.s32.totalorder %s115, %s117
      %p124 = scmp.eq.s32.totalorder %s23, 2
      %p125 = por %p123, %p124
      %p126 = scmp.ne.s32.totalorder %s117, %s118
      %p127 = scmp.eq.s32.totalorder %s23, 0
      %p128 = por %p126, %p127
      %p129 = scmp.ne.s32.totalorder %s117, %s118
      %p130 = scmp.eq.s32.totalorder %s24, 2
      %p131 = por %p129, %p130
      %p133 = scmp.ne.s32.totalorder %s118, %s132
      %p134 = scmp.eq.s32.totalorder %s24, 0
      %p135 = por %p133, %p134
      %s137 = sadd.s32 %s136, 1
      %p140 = scmp.eq.s32.totalorder %s18, 2
      %p141 = scmp.ne.s32.totalorder %s136, %s138
      %p142 = scmp.eq.s32.totalorder %s18, 0
      %p143 = por %p141, %p142
      %p144 = scmp.ne.s32.totalorder %s136, %s138
      %p145 = scmp.eq.s32.totalorder %s23, 2
      %p146 = por %p144, %p145
      %p147 = scmp.ne.s32.totalorder %s138, %s139
      %p148 = scmp.eq.s32.totalorder %s23, 0
      %p149 = por %p147, %p148
      %p150 = scmp.ne.s32.totalorder %s138, %s139
      %p151 = scmp.eq.s32.totalorder %s24, 2
      %p152 = por %p150, %p151
      %p154 = scmp.ne.s32.totalorder %s139, %s153
      %p155 = scmp.eq.s32.totalorder %s24, 0
      %p156 = por %p154, %p155
      %s158 = sadd.s32 %s157, 1
      %p161 = scmp.eq.s32.totalorder %s18, 2
      %p162 = scmp.ne.s32.totalorder %s157, %s159
      %p163 = scmp.eq.s32.totalorder %s18, 0
      %p164 = por %p162, %p163
      %p165 = scmp.ne.s32.totalorder %s157, %s159
      %p166 = scmp.eq.s32.totalorder %s23, 2
      %p167 = por %p165, %p166
      %p168 = scmp.ne.s32.totalorder %s159, %s160
      %p169 = scmp.eq.s32.totalorder %s23, 0
      %p170 = por %p168, %p169
      %p171 = scmp.ne.s32.totalorder %s159, %s160
      %p172 = scmp.eq.s32.totalorder %s24, 2
      %p173 = por %p171, %p172
      %p175 = scmp.ne.s32.totalorder %s160, %s174
      %p176 = scmp.eq.s32.totalorder %s24, 0
      %p177 = por %p175, %p176
      %s178 = ssub.s32 %s18, %s25
      %p179 = scmp.eq.s32.totalorder %s178, 0
      %s181 = sadd.s32 %s180, 1
      %s182 = scalar_select %p179, %s180, %s181
      %p185 = pneg %p179
      %p186 = scmp.eq.s32.totalorder %s18, 2
      %p187 = por %p185, %p186
      %p188 = scmp.ne.s32.totalorder %s180, %s183
      %p189 = scmp.eq.s32.totalorder %s18, 0
      %p190 = por %p188, %p189
      %p191 = scmp.ne.s32.totalorder %s180, %s183
      %p192 = scmp.eq.s32.totalorder %s23, 2
      %p193 = por %p191, %p192
      %p194 = scmp.ne.s32.totalorder %s183, %s184
      %p195 = scmp.eq.s32.totalorder %s23, 0
      %p196 = por %p194, %p195
      %p197 = scmp.ne.s32.totalorder %s183, %s184
      %p198 = scmp.eq.s32.totalorder %s24, 2
      %p199 = por %p197, %p198
      %p201 = scmp.ne.s32.totalorder %s184, %s200
      %p202 = scmp.eq.s32.totalorder %s24, 0
      %p203 = por %p201, %p202
      %s204 = ssub.s32 %s18, %s25
      %p205 = scmp.eq.s32.totalorder %s204, 0
      %s207 = sadd.s32 %s206, 1
      %s208 = scalar_select %p205, %s206, %s207
      %p211 = pneg %p205
      %p212 = scmp.eq.s32.totalorder %s18, 2
      %p213 = por %p211, %p212
      %p214 = scmp.ne.s32.totalorder %s206, %s209
      %p215 = scmp.eq.s32.totalorder %s18, 0
      %p216 = por %p214, %p215
      %p217 = scmp.ne.s32.totalorder %s206, %s209
      %p218 = scmp.eq.s32.totalorder %s23, 2
      %p219 = por %p217, %p218
      %p220 = scmp.ne.s32.totalorder %s209, %s210
      %p221 = scmp.eq.s32.totalorder %s23, 0
      %p222 = por %p220, %p221
      %p223 = scmp.ne.s32.totalorder %s209, %s210
      %p224 = scmp.eq.s32.totalorder %s24, 2
      %p225 = por %p223, %p224
      %p227 = scmp.ne.s32.totalorder %s210, %s226
      %p228 = scmp.eq.s32.totalorder %s24, 0
      %p229 = por %p227, %p228
      %p230 = scmp.le.s32.totalorder 1, %s18
      %p231 = scmp.lt.s32.totalorder %s18, 4
      %p232 = pnand %p230, %p231
      %p233 = pneg %p232
      // Predicated region
      $region9: #{tpu_custom_call.1} parent=5 // pred_check
        _
      $region10: #{tpu_custom_call.1} parent=5 // pred_check_branch
        %235 = sbr.rel (%p232) target = $region12
      $region11: #{tpu_custom_call.1} parent=5 // pred_region
        %s236 = ssub.s32 %s18, 1
        // Predicated region
        $region13: #{tpu_custom_call.1} parent=11 // pred_check
          %p237 = pneg %p65
        $region14: #{tpu_custom_call.1} parent=11 // pred_check_branch
          %239 = sbr.rel (%p237) target = $region16
        $region15: #{tpu_custom_call.1} parent=11 // pred_region
          _
        $region16: #{tpu_custom_call.1} parent=11 // pred_fallthru
          _
        // Predicated region
        $region17: #{tpu_custom_call.1} parent=11 // pred_check
          %p240 = pneg %p86
        $region18: #{tpu_custom_call.1} parent=11 // pred_check_branch
          %242 = sbr.rel (%p240) target = $region20
        $region19: #{tpu_custom_call.1} parent=11 // pred_region
          _
        $region20: #{tpu_custom_call.1} parent=11 // pred_fallthru
          _
        // Predicated region
        $region21: #{tpu_custom_call.1} parent=11 // pred_check
          %p243 = pneg %p107
        $region22: #{tpu_custom_call.1} parent=11 // pred_check_branch
          %245 = sbr.rel (%p243) target = $region24
        $region23: #{tpu_custom_call.1} parent=11 // pred_region
          _
        $region24: #{tpu_custom_call.1} parent=11 // pred_fallthru
          _
        // Predicated region
        $region25: #{tpu_custom_call.1} parent=11 // pred_check
          %p246 = pneg %p128
        $region26: #{tpu_custom_call.1} parent=11 // pred_check_branch
          %248 = sbr.rel (%p246) target = $region28
        $region27: #{tpu_custom_call.1} parent=11 // pred_region
          _
        $region28: #{tpu_custom_call.1} parent=11 // pred_fallthru
          _
        // Predicated region
        $region29: #{tpu_custom_call.1} parent=11 // pred_check
          %p249 = pneg %p149
        $region30: #{tpu_custom_call.1} parent=11 // pred_check_branch
          %251 = sbr.rel (%p249) target = $region32
        $region31: #{tpu_custom_call.1} parent=11 // pred_region
          _
        $region32: #{tpu_custom_call.1} parent=11 // pred_fallthru
          _
        // Predicated region
        $region33: #{tpu_custom_call.1} parent=11 // pred_check
          %p252 = pneg %p170
        $region34: #{tpu_custom_call.1} parent=11 // pred_check_branch
          %254 = sbr.rel (%p252) target = $region36
        $region35: #{tpu_custom_call.1} parent=11 // pred_region
          _
        $region36: #{tpu_custom_call.1} parent=11 // pred_fallthru
          _
      $region12: #{tpu_custom_call.1} parent=5 // pred_fallthru
        _
      %p255 = scmp.lt.s32.totalorder %s18, 3
      // Predicated region
      $region37: #{tpu_custom_call.1} parent=5 // pred_check
        %p256 = pneg %p255
      $region38: #{tpu_custom_call.1} parent=5 // pred_check_branch
        %258 = sbr.rel (%p256) target = $region40
      $region39: #{tpu_custom_call.1} parent=5 // pred_region
        // Predicated region
        $region41: #{tpu_custom_call.1} parent=39 // pred_check
          %p259 = pneg %p38
        $region42: #{tpu_custom_call.1} parent=39 // pred_check_branch
          %261 = sbr.rel (%p259) target = $region44
        $region43: #{tpu_custom_call.1} parent=39 // pred_region
          %s262 = smul.u32 16, %s18
          %s263 = ssub.s32 34, %s262
          %p264 = scmp.lt.s32.totalorder %s263, 16
          %s265 = scalar_select %p264, %s263, 16
          %s266 = smul.u32 128, %s265
          %p267 = scmp.lt.s32.totalorder %s262, 33
          %s268 = scalar_select %p267, %s262, 33
          %s269 = smul.addr %s268, 8
          %s270 = scalar_lea.vmem %s0, %s269
          %s271 = smul.u32 16, %s18
          %s272 = ssub.s32 34, %s271
          %p273 = scmp.lt.s32.totalorder %s272, 16
          %s274 = scalar_select %p273, %s272, 16
          %s275 = smul.u32 128, %s274
        $region44: #{tpu_custom_call.1} parent=39 // pred_fallthru
          _
      $region40: #{tpu_custom_call.1} parent=5 // pred_fallthru
        _
      %p276 = scmp.le.s32.totalorder 1, %s18
      %p277 = scmp.lt.s32.totalorder %s18, 4
      %p278 = pnand %p276, %p277
      %p279 = pneg %p278
      // Predicated region
      $region45: #{tpu_custom_call.1} parent=5 // pred_check
        _
      $region46: #{tpu_custom_call.1} parent=5 // pred_check_branch
        %281 = sbr.rel (%p278) target = $region48
      $region47: #{tpu_custom_call.1} parent=5 // pred_region
        %s282 = ssub.s32 %s18, 1
        %s283 = smul.u32 16, %s23
        %s284 = ssub.s32 34, %s283
        %p285 = scmp.lt.s32.totalorder %s284, 16
        %s286 = scalar_select %p285, %s284, 16
        %s287 = smul.u32 128, %s286
        %p288 = scmp.lt.s32.totalorder %s283, 33
        %s289 = scalar_select %p288, %s283, 33
        %s290 = smul.addr %s289, 8
        %s291 = scalar_lea.vmem %s0, %s290
        %p292 = pneg %p44
        %p293 = pneg %p41
        %p294 = pneg %p65
        %p295 = pneg %p62
        %p296 = pneg %p86
        %p297 = pneg %p83
        %p298 = pneg %p107
        %p299 = pneg %p104
        %p300 = pneg %p128
        %p301 = pneg %p125
        %p302 = pneg %p149
        %p303 = pneg %p146
        %p304 = pneg %p170
        %p305 = pneg %p167
        %p306 = pneg %p196
        %p307 = pneg %p193
        %s308 = sand.u32 %s183, 1
        %s309 = sand.u32 %s183, 1
        %s310 = smul.addr %s309, 128
        %s311 = scalar_lea.vmem [#allocation2], %s310
        %p312 = pneg %p222
        %p313 = pneg %p219
        %s314 = sand.u32 %s209, 1
        %s315 = scalar_lea.sflag [#allocation4], %s314
        %s316 = sand.u32 %s209, 1
        %s317 = scalar_lea.vmem [#allocation3], %s316
        %s318 = smul.u32 16, %s23
        %s319 = ssub.s32 34, %s318
        %p320 = scmp.lt.s32.totalorder %s319, 16
        %s321 = scalar_select %p320, %s319, 16
        %s322 = smul.u32 128, %s321
        %p323 = scmp.lt.s32.totalorder %s318, 33
        %s324 = scalar_select %p323, %s318, 33
        %s325 = smul.addr %s324, 8
        %s326 = scalar_lea.vmem %s0, %s325
        %s327 = smul.u32 16, %s23
        %s328 = ssub.s32 34, %s327
        %p329 = scmp.lt.s32.totalorder %s328, 16
        %s330 = scalar_select %p329, %s328, 16
        %s331 = smul.u32 128, %s330
        %s332 = smul.u32 16, %s23
        %s333 = ssub.s32 34, %s332
        %p334 = scmp.lt.s32.totalorder %s333, 16
        %s335 = scalar_select %p334, %s333, 16
        %s336 = smul.u32 128, %s335
        %v338 = vld [vmem:[%s326] sm:$0xff]
        %v339 = vld [vmem:[%s326 + $0x8] sm:$0xff]
        %v340 = vld [vmem:[%s326 + $0x10] sm:$0xff]
        %v341 = vld [vmem:[%s326 + $0x18] sm:$0xff]
        %v342 = vld [vmem:[%s326 + $0x20] sm:$0xff]
        %v343 = vld [vmem:[%s326 + $0x28] sm:$0xff]
        %v344 = vld [vmem:[%s326 + $0x30] sm:$0xff]
        %v345 = vld [vmem:[%s326 + $0x38] sm:$0xff]
        %v346 = vld [vmem:[%s326 + $0x40] sm:$0xff]
        %v347 = vld [vmem:[%s326 + $0x48] sm:$0xff]
        %v348 = vld [vmem:[%s326 + $0x50] sm:$0xff]
        %v349 = vld [vmem:[%s326 + $0x58] sm:$0xff]
        %v350 = vld [vmem:[%s326 + $0x60] sm:$0xff]
        %v351 = vld [vmem:[%s326 + $0x68] sm:$0xff]
        %v352 = vld [vmem:[%s326 + $0x70] sm:$0xff]
        %v353 = vld [vmem:[%s326 + $0x78] sm:$0xff]
        %354 = vxpose.xlu0.b32.start [1/16] %v338, 128
        %355 = vxpose.xlu0.b32.cont [2/16] %v339, 128
        %356 = vxpose.xlu0.b32.cont [3/16] %v340, 128
        %357 = vxpose.xlu0.b32.cont [4/16] %v341, 128
        %358 = vxpose.xlu0.b32.cont [5/16] %v342, 128
        %359 = vxpose.xlu0.b32.cont [6/16] %v343, 128
        %360 = vxpose.xlu0.b32.cont [7/16] %v344, 128
        %361 = vxpose.xlu0.b32.cont [8/16] %v345, 128
        %362 = vxpose.xlu0.b32.cont [9/16] %v346, 128
        %363 = vxpose.xlu0.b32.cont [10/16] %v347, 128
        %364 = vxpose.xlu0.b32.cont [11/16] %v348, 128
        %365 = vxpose.xlu0.b32.cont [12/16] %v349, 128
        %366 = vxpose.xlu0.b32.cont [13/16] %v350, 128
        %367 = vxpose.xlu0.b32.cont [14/16] %v351, 128
        %368 = vxpose.xlu0.b32.cont [15/16] %v352, 128
        %369 = vxpose.xlu0.b32.end [16/16] %v353, 128
        %v370 = vpop.trf.xlu0
        %v371 = vpop.trf.xlu0
        %v372 = vpop.trf.xlu0
        %v373 = vpop.trf.xlu0
        %v374 = vpop.trf.xlu0
        %v375 = vpop.trf.xlu0
        %v376 = vpop.trf.xlu0
        %v377 = vpop.trf.xlu0
        %v378 = vpop.trf.xlu0
        %v379 = vpop.trf.xlu0
        %v380 = vpop.trf.xlu0
        %v381 = vpop.trf.xlu0
        %v382 = vpop.trf.xlu0
        %v383 = vpop.trf.xlu0
        %v384 = vpop.trf.xlu0
        %v385 = vpop.trf.xlu0
        %v386 = vpack.c.bf16 %v370, %v370
        %v387 = vld [vmem:[%s1] sm:$0xf]
        %v388 = vld [vmem:[%s1 + $0x4] sm:$0xf]
        %v389 = vld [vmem:[%s1 + $0x8] sm:$0xf]
        %v390 = vld [vmem:[%s1 + $0xc] sm:$0xf]
        %v391 = vld [vmem:[%s2] sm:$0xff]
        %v392 = vld [vmem:[%s2 + $0x8] sm:$0xff]
        %v393 = vld [vmem:[%s2 + $0x10] sm:$0xff]
        %v394 = vld [vmem:[%s2 + $0x18] sm:$0xff]
        %396 = vset.pattern.permute.xlu0 0
        %397 = vperm.xlu0 %396, %v391
        %v398 = vpop.permute.xlu0 %397
        %401 = vset.pattern.permute.xlu0 0
        %402 = vperm.xlu0 %401, %v392
        %v403 = vpop.permute.xlu0 %402
        %406 = vset.pattern.permute.xlu0 0
        %407 = vperm.xlu0 %406, %v393
        %v408 = vpop.permute.xlu0 %407
        %411 = vset.pattern.permute.xlu0 0
        %412 = vperm.xlu0 %411, %v394
        %v413 = vpop.permute.xlu0 %412
        %v419 = vunpack.c.l.b16 %v387
        %v420 = vunpack.c.l.b16 %v388
        %v421 = vunpack.c.l.b16 %v389
        %v422 = vunpack.c.l.b16 %v390
        %v423 = vpack.c.b16 %v420, %v419
        %v424 = vpack.c.b16 %v422, %v421
        %vm425 = vcmask 64512
        %v427 = vsel %vm425, %v423, 0
        %v430 = vsel %vm425, %v424, 0
        %vm432 = vcmask 1043456
        %v434 = vsel %vm432, %v386, 0
        %436 = vmatprep.subr.bf16.mxu0 0
        %437 = vmatpush1.bf16.msra.mxu0 0
        %438 = vmatprep.subr.bf16.mxu0 0
        %439 = vmatpush1.bf16.msra.mxu0 0
        %440 = vmatprep.subr.bf16.mxu0 0
        %441 = vmatpush1.bf16.msra.mxu0 0
        %442 = vmatprep.subr.bf16.mxu0 0
        %443 = vmatpush1.bf16.msra.mxu0 0
        %444 = vmatprep.subr.bf16.mxu0 0
        %445 = vmatpush1.bf16.msra.mxu0 0
        %446 = vmatprep.subr.bf16.mxu0 0
        %447 = vmatpush1.bf16.msra.mxu0 0
        %448 = vmatprep.subr.bf16.mxu0 0
        %449 = vmatpush1.bf16.msra.mxu0 0
        %450 = vmatprep.subr.bf16.mxu0 0
        %451 = vmatpush1.bf16.msra.mxu0 %v434
        %452 = vmatprep.subr.bf16.mxu0 0
        %453 = vmatpush2.bf16.msra.mxu0 0
        %454 = vmatprep.subr.bf16.mxu0 0
        %455 = vmatpush2.bf16.msra.mxu0 0
        %456 = vmatprep.subr.bf16.mxu0 0
        %457 = vmatpush2.bf16.msra.mxu0 0
        %458 = vmatprep.subr.bf16.mxu0 0
        %459 = vmatpush2.bf16.msra.mxu0 0
        %460 = vmatprep.subr.bf16.mxu0 0
        %461 = vmatpush2.bf16.msra.mxu0 0
        %462 = vmatprep.subr.bf16.mxu0 0
        %463 = vmatpush2.bf16.msra.mxu0 0
        %464 = vmatprep.subr.bf16.mxu0 0
        %465 = vmatpush2.bf16.msra.mxu0 0
        %466 = vmatprep.subr.bf16.mxu0 0
        %467 = vmatpush2.bf16.msra.mxu0 0
        %468 = vmatprep.mubr.bf16.mxu0 0
        %469 = vmatmul.mubr.bf16.gmra.mxu0 %v427
        %v470 = vpop.f32.mrf.mxu0
        %v471 = vadd.f32 %v398, %v470
        %v472 = vpop.f32.mrf.mxu0
        %v473 = vpop.f32.mrf.mxu0
        %v474 = vadd.f32 %v403, %v473
        %v475 = vpop.f32.mrf.mxu0
        %476 = vmatprep.mubr.bf16.mxu0 0
        %477 = vmatmul.mubr.bf16.gmra.mxu0 %v430
        %v478 = vpop.f32.mrf.mxu0
        %v479 = vadd.f32 %v408, %v478
        %v480 = vpop.f32.mrf.mxu0
        %v481 = vpop.f32.mrf.mxu0
        %v482 = vadd.f32 %v413, %v481
        %v483 = vpop.f32.mrf.mxu0
        %484 = vdwg.mxu0
        %v485 = vmax.f32 %v471, 0.0
        %v486 = vmax.f32 %v474, 0.0
        %v487 = vmax.f32 %v479, 0.0
        %v488 = vmax.f32 %v482, 0.0
        %v489 = vld [vmem:[%s3] sm:$0xf]
        %v490 = vld [vmem:[%s3 + $0x4] sm:$0xf]
        %v491 = vld [vmem:[%s3 + $0x8] sm:$0xf]
        %v492 = vld [vmem:[%s3 + $0xc] sm:$0xf]
        %v493 = vpack.c.bf16 %v486, %v485
        %v494 = vpack.c.bf16 %v488, %v487
        %v495 = vld [vmem:[%s4] sm:$0xff]
        %v496 = vld [vmem:[%s4 + $0x8] sm:$0xff]
        %v497 = vld [vmem:[%s4 + $0x10] sm:$0xff]
        %v498 = vld [vmem:[%s4 + $0x18] sm:$0xff]
        %500 = vset.pattern.permute.xlu0 0
        %501 = vperm.xlu0 %500, %v495
        %v502 = vpop.permute.xlu0 %501
        %505 = vset.pattern.permute.xlu0 0
        %506 = vperm.xlu0 %505, %v496
        %v507 = vpop.permute.xlu0 %506
        %510 = vset.pattern.permute.xlu0 0
        %511 = vperm.xlu0 %510, %v497
        %v512 = vpop.permute.xlu0 %511
        %515 = vset.pattern.permute.xlu0 0
        %516 = vperm.xlu0 %515, %v498
        %v517 = vpop.permute.xlu0 %516
        %v523 = vunpack.c.l.b16 %v489
        %v524 = vunpack.c.l.b16 %v490
        %v525 = vunpack.c.l.b16 %v491
        %v526 = vunpack.c.l.b16 %v492
        %v527 = vpack.c.b16 %v524, %v523
        %v528 = vpack.c.b16 %v526, %v525
        %vm529 = vcmask 261120
        %v531 = vsel %vm529, %v527, 0
        %v534 = vsel %vm529, %v528, 0
        %536 = vmatprep.subr.bf16.mxu0 0
        %537 = vmatpush1.bf16.msra.mxu0 0
        %538 = vmatprep.subr.bf16.mxu0 0
        %539 = vmatpush1.bf16.msra.mxu0 0
        %540 = vmatprep.subr.bf16.mxu0 0
        %541 = vmatpush1.bf16.msra.mxu0 0
        %542 = vmatprep.subr.bf16.mxu0 0
        %543 = vmatpush1.bf16.msra.mxu0 0
        %544 = vmatprep.subr.bf16.mxu0 0
        %545 = vmatpush1.bf16.msra.mxu0 0
        %546 = vmatprep.subr.bf16.mxu0 0
        %547 = vmatpush1.bf16.msra.mxu0 0
        %548 = vmatprep.subr.bf16.mxu0 0
        %549 = vmatpush1.bf16.msra.mxu0 %v494
        %550 = vmatprep.subr.bf16.mxu0 0
        %551 = vmatpush1.bf16.msra.mxu0 %v493
        %552 = vmatprep.subr.bf16.mxu0 0
        %553 = vmatpush2.bf16.msra.mxu0 0
        %554 = vmatprep.subr.bf16.mxu0 0
        %555 = vmatpush2.bf16.msra.mxu0 0
        %556 = vmatprep.subr.bf16.mxu0 0
        %557 = vmatpush2.bf16.msra.mxu0 0
        %558 = vmatprep.subr.bf16.mxu0 0
        %559 = vmatpush2.bf16.msra.mxu0 0
        %560 = vmatprep.subr.bf16.mxu0 0
        %561 = vmatpush2.bf16.msra.mxu0 0
        %562 = vmatprep.subr.bf16.mxu0 0
        %563 = vmatpush2.bf16.msra.mxu0 0
        %564 = vmatprep.subr.bf16.mxu0 0
        %565 = vmatpush2.bf16.msra.mxu0 0
        %566 = vmatprep.subr.bf16.mxu0 0
        %567 = vmatpush2.bf16.msra.mxu0 0
        %568 = vmatprep.mubr.bf16.mxu0 0
        %569 = vmatmul.mubr.bf16.gmra.mxu0 %v531
        %v570 = vpop.f32.mrf.mxu0
        %v571 = vadd.f32 %v502, %v570
        %v572 = vpop.f32.mrf.mxu0
        %v573 = vpop.f32.mrf.mxu0
        %v574 = vadd.f32 %v507, %v573
        %v575 = vpop.f32.mrf.mxu0
        %576 = vmatprep.mubr.bf16.mxu0 0
        %577 = vmatmul.mubr.bf16.gmra.mxu0 %v534
        %v578 = vpop.f32.mrf.mxu0
        %v579 = vadd.f32 %v512, %v578
        %v580 = vpop.f32.mrf.mxu0
        %v581 = vpop.f32.mrf.mxu0
        %v582 = vadd.f32 %v517, %v581
        %v583 = vpop.f32.mrf.mxu0
        %584 = vdwg.mxu0
        %v585 = vmax.f32 %v571, 0.0
        %v586 = vmax.f32 %v574, 0.0
        %v587 = vmax.f32 %v579, 0.0
        %v588 = vmax.f32 %v582, 0.0
        %v589 = vld [vmem:[%s5] sm:$0xf]
        %v590 = vld [vmem:[%s5 + $0x4] sm:$0xf]
        %v591 = vpack.c.bf16 %v586, %v585
        %v592 = vpack.c.bf16 %v588, %v587
        %v593 = vld [vmem:[%s6] sm:$0xff]
        %v594 = vld [vmem:[%s6 + $0x8] sm:$0xff]
        %596 = vset.pattern.permute.xlu0 0
        %597 = vperm.xlu0 %596, %v593
        %v598 = vpop.permute.xlu0 %597
        %601 = vset.pattern.permute.xlu0 0
        %602 = vperm.xlu0 %601, %v594
        %v603 = vpop.permute.xlu0 %602
        %v607 = vunpack.c.l.b16 %v589
        %v608 = vunpack.c.l.b16 %v590
        %v609 = vpack.c.b16 %v608, %v607
        %v611 = vsel %vm529, %v609, 0
        %613 = vmatprep.subr.bf16.mxu0 0
        %614 = vmatpush1.bf16.msra.mxu0 0
        %615 = vmatprep.subr.bf16.mxu0 0
        %616 = vmatpush1.bf16.msra.mxu0 0
        %617 = vmatprep.subr.bf16.mxu0 0
        %618 = vmatpush1.bf16.msra.mxu0 0
        %619 = vmatprep.subr.bf16.mxu0 0
        %620 = vmatpush1.bf16.msra.mxu0 0
        %621 = vmatprep.subr.bf16.mxu0 0
        %622 = vmatpush1.bf16.msra.mxu0 0
        %623 = vmatprep.subr.bf16.mxu0 0
        %624 = vmatpush1.bf16.msra.mxu0 0
        %625 = vmatprep.subr.bf16.mxu0 0
        %626 = vmatpush1.bf16.msra.mxu0 %v592
        %627 = vmatprep.subr.bf16.mxu0 0
        %628 = vmatpush1.bf16.msra.mxu0 %v591
        %629 = vmatprep.subr.bf16.mxu0 0
        %630 = vmatpush2.bf16.msra.mxu0 0
        %631 = vmatprep.subr.bf16.mxu0 0
        %632 = vmatpush2.bf16.msra.mxu0 0
        %633 = vmatprep.subr.bf16.mxu0 0
        %634 = vmatpush2.bf16.msra.mxu0 0
        %635 = vmatprep.subr.bf16.mxu0 0
        %636 = vmatpush2.bf16.msra.mxu0 0
        %637 = vmatprep.subr.bf16.mxu0 0
        %638 = vmatpush2.bf16.msra.mxu0 0
        %639 = vmatprep.subr.bf16.mxu0 0
        %640 = vmatpush2.bf16.msra.mxu0 0
        %641 = vmatprep.subr.bf16.mxu0 0
        %642 = vmatpush2.bf16.msra.mxu0 0
        %643 = vmatprep.subr.bf16.mxu0 0
        %644 = vmatpush2.bf16.msra.mxu0 0
        %645 = vmatprep.mubr.bf16.mxu0 0
        %646 = vmatmul.mubr.bf16.gmra.mxu0 %v611
        %v647 = vpop.f32.mrf.mxu0
        %v648 = vadd.f32 %v598, %v647
        %v649 = vpop.f32.mrf.mxu0
        %v650 = vpop.f32.mrf.mxu0
        %v651 = vadd.f32 %v603, %v650
        %v652 = vpop.f32.mrf.mxu0
        %653 = vdwg.mxu0
        %v654 = vmul.f32 %v651, -0.5
        %v655 = vsub.f32 %v370, %v648
        %v656 = vmul.f32 %v654, 1.442695
        %v657 = vpow.pop %v656
        %v658 = vmul.f32 %v655, %v657
        %659 = vxpose.xlu0.b32.start [1/16] %v658, 128
        %660 = vxpose.xlu0.b32.cont [2/16] 0.0, 128
        %661 = vxpose.xlu0.b32.cont [3/16] 0.0, 128
        %662 = vxpose.xlu0.b32.cont [4/16] 0.0, 128
        %663 = vxpose.xlu0.b32.cont [5/16] 0.0, 128
        %664 = vxpose.xlu0.b32.cont [6/16] 0.0, 128
        %665 = vxpose.xlu0.b32.cont [7/16] 0.0, 128
        %666 = vxpose.xlu0.b32.cont [8/16] 0.0, 128
        %667 = vxpose.xlu0.b32.cont [9/16] 0.0, 128
        %668 = vxpose.xlu0.b32.cont [10/16] 0.0, 128
        %669 = vxpose.xlu0.b32.cont [11/16] 0.0, 128
        %670 = vxpose.xlu0.b32.cont [12/16] 0.0, 128
        %671 = vxpose.xlu0.b32.cont [13/16] 0.0, 128
        %672 = vxpose.xlu0.b32.cont [14/16] 0.0, 128
        %673 = vxpose.xlu0.b32.cont [15/16] 0.0, 128
        %674 = vxpose.xlu0.b32.end [16/16] 0.0, 128
        %v675 = vpop.trf.xlu0
        %v676 = vpop.trf.xlu0
        %v677 = vpop.trf.xlu0
        %v678 = vpop.trf.xlu0
        %v679 = vpop.trf.xlu0
        %v680 = vpop.trf.xlu0
        %v681 = vpop.trf.xlu0
        %v682 = vpop.trf.xlu0
        %v683 = vpop.trf.xlu0
        %v684 = vpop.trf.xlu0
        %v685 = vpop.trf.xlu0
        %v686 = vpop.trf.xlu0
        %v687 = vpop.trf.xlu0
        %v688 = vpop.trf.xlu0
        %v689 = vpop.trf.xlu0
        %v690 = vpop.trf.xlu0
        %691 = vst.msk [vmem:[%s311] sm:$0xff] %vm425, %v675
        %692 = vst.msk [vmem:[%s311 + $0x8] sm:$0xff] %vm425, %v676
        %693 = vst.msk [vmem:[%s311 + $0x10] sm:$0xff] %vm425, %v677
        %694 = vst.msk [vmem:[%s311 + $0x18] sm:$0xff] %vm425, %v678
        %695 = vst.msk [vmem:[%s311 + $0x20] sm:$0xff] %vm425, %v679
        %696 = vst.msk [vmem:[%s311 + $0x28] sm:$0xff] %vm425, %v680
        %697 = vst.msk [vmem:[%s311 + $0x30] sm:$0xff] %vm425, %v681
        %698 = vst.msk [vmem:[%s311 + $0x38] sm:$0xff] %vm425, %v682
        %699 = vst.msk [vmem:[%s311 + $0x40] sm:$0xff] %vm425, %v683
        %700 = vst.msk [vmem:[%s311 + $0x48] sm:$0xff] %vm425, %v684
        %701 = vst.msk [vmem:[%s311 + $0x50] sm:$0xff] %vm425, %v685
        %702 = vst.msk [vmem:[%s311 + $0x58] sm:$0xff] %vm425, %v686
        %703 = vst.msk [vmem:[%s311 + $0x60] sm:$0xff] %vm425, %v687
        %704 = vst.msk [vmem:[%s311 + $0x68] sm:$0xff] %vm425, %v688
        %705 = vst.msk [vmem:[%s311 + $0x70] sm:$0xff] %vm425, %v689
        %706 = vst.msk [vmem:[%s311 + $0x78] sm:$0xff] %vm425, %v690
        %v707 = vrot.slane %v654, 4
        %v708 = vadd.f32 %v654, %v707
        %v709 = vrot.slane %v708, 2
        %v710 = vadd.f32 %v708, %v709
        %v711 = vrot.slane %v710, 1
        %v712 = vadd.f32 %v710, %v711
        %713 = vst [vmem:[%s317] sm:$0x1] %v712
        %s714 = sand.u32 %s183, 1
        %s715 = sand.u32 %s183, 1
        %s716 = smul.addr %s715, 128
        %s717 = scalar_lea.vmem [#allocation2], %s716
        %s718 = sand.u32 %s209, 1
        %s719 = scalar_lea.sflag [#allocation4], %s718
        %s720 = sand.u32 %s209, 1
        %s721 = scalar_lea.vmem [#allocation3], %s720
        // Predicated region
        $region49: #{tpu_custom_call.1} parent=47 // pred_check
          %p722 = pneg %p193
        $region50: #{tpu_custom_call.1} parent=47 // pred_check_branch
          %724 = sbr.rel (%p722) target = $region52
        $region51: #{tpu_custom_call.1} parent=47 // pred_region
          %s725 = smul.u32 16, %s23
          %s726 = ssub.s32 34, %s725
          %p727 = scmp.lt.s32.totalorder %s726, 16
          %s728 = scalar_select %p727, %s726, 16
          %s729 = smul.u32 128, %s728
          %p730 = scmp.ne.s32.totalorder 0, %s729
          %s731 = smul.addr %s725, 8
          %s732 = scalar_lea.vmem %s7, %s731
          // Predicated region
          $region53: #{tpu_custom_call.1} parent=51 // pred_check
            %p733 = pneg %p730
          $region54: #{tpu_custom_call.1} parent=51 // pred_check_branch
            %735 = sbr.rel (%p733) target = $region56
          $region55: #{tpu_custom_call.1} parent=51 // pred_region
            // Predicated region
            $region57: #{tpu_custom_call.1} parent=55 // pred_check
              _
            $region58: #{tpu_custom_call.1} parent=55 // pred_check_branch
              %737 = sbr.rel (0) target = $region60
            $region59: #{tpu_custom_call.1} parent=55 // pred_region
              // Predicated region
              $region79: #{tpu_custom_call.1} parent=59 // pred_check
                _
              $region80: #{tpu_custom_call.1} parent=59 // pred_check_branch
                %817 = sbr.rel (0) target = $region82
              $region81: #{tpu_custom_call.1} parent=59 // pred_region
                %s818 = sshrl.u32 %s728, 4
                // While loop
                $region83: #{tpu_custom_call.1} parent=81 // loop_pre_header
                  _
                $region84: #{tpu_custom_call.1} parent=81 // loop_header
                  %s820 = sphi 0, %s822
                  %p821 = scmp.ge.s32.totalorder %s820, %s818
                  %s825 = sphi 0, %s862
                  %s826 = sphi %s717, %s865
                  %s827 = sphi %s732, %s866
                $region85: #{tpu_custom_call.1} parent=81 // loop_header_branch
                  %824 = sbr.rel (%p821) target = $region89
                $region86: #{tpu_custom_call.1} parent=81 // loop_body
                  %v828 = vld [vmem:[%s826] sm:$0xff]
                  %829 = vst [vmem:[%s827] sm:$0xff] %v828
                  %v830 = vld [vmem:[%s826 + $0x8] sm:$0xff]
                  %831 = vst [vmem:[%s827 + $0x8] sm:$0xff] %v830
                  %v832 = vld [vmem:[%s826 + $0x10] sm:$0xff]
                  %833 = vst [vmem:[%s827 + $0x10] sm:$0xff] %v832
                  %v834 = vld [vmem:[%s826 + $0x18] sm:$0xff]
                  %835 = vst [vmem:[%s827 + $0x18] sm:$0xff] %v834
                  %v836 = vld [vmem:[%s826 + $0x20] sm:$0xff]
                  %837 = vst [vmem:[%s827 + $0x20] sm:$0xff] %v836
                  %v838 = vld [vmem:[%s826 + $0x28] sm:$0xff]
                  %839 = vst [vmem:[%s827 + $0x28] sm:$0xff] %v838
                  %v840 = vld [vmem:[%s826 + $0x30] sm:$0xff]
                  %841 = vst [vmem:[%s827 + $0x30] sm:$0xff] %v840
                  %v842 = vld [vmem:[%s826 + $0x38] sm:$0xff]
                  %843 = vst [vmem:[%s827 + $0x38] sm:$0xff] %v842
                  %v844 = vld [vmem:[%s826 + $0x40] sm:$0xff]
                  %845 = vst [vmem:[%s827 + $0x40] sm:$0xff] %v844
                  %v846 = vld [vmem:[%s826 + $0x48] sm:$0xff]
                  %847 = vst [vmem:[%s827 + $0x48] sm:$0xff] %v846
                  %v848 = vld [vmem:[%s826 + $0x50] sm:$0xff]
                  %849 = vst [vmem:[%s827 + $0x50] sm:$0xff] %v848
                  %v850 = vld [vmem:[%s826 + $0x58] sm:$0xff]
                  %851 = vst [vmem:[%s827 + $0x58] sm:$0xff] %v850
                  %v852 = vld [vmem:[%s826 + $0x60] sm:$0xff]
                  %853 = vst [vmem:[%s827 + $0x60] sm:$0xff] %v852
                  %v854 = vld [vmem:[%s826 + $0x68] sm:$0xff]
                  %855 = vst [vmem:[%s827 + $0x68] sm:$0xff] %v854
                  %v856 = vld [vmem:[%s826 + $0x70] sm:$0xff]
                  %857 = vst [vmem:[%s827 + $0x70] sm:$0xff] %v856
                  %v858 = vld [vmem:[%s826 + $0x78] sm:$0xff]
                  %859 = vst [vmem:[%s827 + $0x78] sm:$0xff] %v858
                  %s860 = sadd.s32 1, %s825
                  %p861 = scmp.ge.s32.totalorder %s860, %s818
                  %s862 = scalar_select %p861, 0, %s860
                  %s863 = smul.u32 %s862, 128
                  %s864 = smul.u32 %s862, 128
                  %s865 = scalar_lea.vmem %s717, %s863 [#allocation2]
                  %s866 = scalar_lea.vmem %s732, %s864
                $region87: #{tpu_custom_call.1} parent=81 // loop_footer
                  %s822 = sadd.s32 %s820, 1
                $region88: #{tpu_custom_call.1} parent=81 // loop_footer_branch
                  %819 = sbr.rel target = $region84
                $region89: #{tpu_custom_call.1} parent=81 // loop_exit
                  _
                %s867 = sshrl.u32 %s728, 4
                %s868 = sand.u32 %s728, 15
                %s869 = smul.u32 %s867, 16
                %s870 = smul.u32 8, %s869
                %s871 = scalar_lea.vmem %s717, %s870 [#allocation2]
                %s872 = smul.u32 8, %s869
                %s873 = scalar_lea.vmem %s732, %s872
                // While loop
                $region90: #{tpu_custom_call.1} parent=81 // loop_pre_header
                  _
                $region91: #{tpu_custom_call.1} parent=81 // loop_header
                  %s875 = sphi 0, %s877
                  %p876 = scmp.ge.s32.totalorder %s875, %s868
                  %s880 = sphi 0, %s887
                  %s881 = sphi %s871, %s890
                  %s882 = sphi %s873, %s891
                $region92: #{tpu_custom_call.1} parent=81 // loop_header_branch
                  %879 = sbr.rel (%p876) target = $region96
                $region93: #{tpu_custom_call.1} parent=81 // loop_body
                  %v883 = vld [vmem:[%s881] sm:$0xff]
                  %884 = vst [vmem:[%s882] sm:$0xff] %v883
                  %s885 = sadd.s32 1, %s880
                  %p886 = scmp.ge.s32.totalorder %s885, %s868
                  %s887 = scalar_select %p886, 0, %s885
                  %s888 = smul.u32 %s887, 8
                  %s889 = smul.u32 %s887, 8
                  %s890 = scalar_lea.vmem %s871, %s888 [#allocation2]
                  %s891 = scalar_lea.vmem %s873, %s889
                $region94: #{tpu_custom_call.1} parent=81 // loop_footer
                  %s877 = sadd.s32 %s875, 1
                $region95: #{tpu_custom_call.1} parent=81 // loop_footer_branch
                  %874 = sbr.rel target = $region91
                $region96: #{tpu_custom_call.1} parent=81 // loop_exit
                  _
              $region82: #{tpu_custom_call.1} parent=59 // pred_fallthru
                _
              // Predicated region
              $region97: #{tpu_custom_call.1} parent=59 // pred_check
                _
              $region98: #{tpu_custom_call.1} parent=59 // pred_check_branch
                %893 = sbr.rel target = $region100
              $region99: #{tpu_custom_call.1} parent=59 // pred_region
                _
              $region100: #{tpu_custom_call.1} parent=59 // pred_fallthru
                _
            $region60: #{tpu_custom_call.1} parent=55 // pred_fallthru
              _
            // Predicated region
            $region61: #{tpu_custom_call.1} parent=55 // pred_check
              _
            $region62: #{tpu_custom_call.1} parent=55 // pred_check_branch
              %739 = sbr.rel target = $region64
            $region63: #{tpu_custom_call.1} parent=55 // pred_region
              %s741 = ssub.s32 256, 1
              %s742 = sshrl.u32 %s728, 4
              // While loop
              $region65: #{tpu_custom_call.1} parent=63 // loop_pre_header
                _
              $region66: #{tpu_custom_call.1} parent=63 // loop_header
                %s744 = sphi 0, %s746
                %p745 = scmp.ge.s32.totalorder %s744, %s742
                %s749 = sphi 0, %s786
                %s750 = sphi %s717, %s789
                %s751 = sphi %s732, %s790
              $region67: #{tpu_custom_call.1} parent=63 // loop_header_branch
                %748 = sbr.rel (%p745) target = $region71
              $region68: #{tpu_custom_call.1} parent=63 // loop_body
                %v752 = vld [vmem:[%s750] sm:%s741]
                %753 = vst [vmem:[%s751] sm:%s741] %v752
                %v754 = vld [vmem:[%s750 + $0x8] sm:%s741]
                %755 = vst [vmem:[%s751 + $0x8] sm:%s741] %v754
                %v756 = vld [vmem:[%s750 + $0x10] sm:%s741]
                %757 = vst [vmem:[%s751 + $0x10] sm:%s741] %v756
                %v758 = vld [vmem:[%s750 + $0x18] sm:%s741]
                %759 = vst [vmem:[%s751 + $0x18] sm:%s741] %v758
                %v760 = vld [vmem:[%s750 + $0x20] sm:%s741]
                %761 = vst [vmem:[%s751 + $0x20] sm:%s741] %v760
                %v762 = vld [vmem:[%s750 + $0x28] sm:%s741]
                %763 = vst [vmem:[%s751 + $0x28] sm:%s741] %v762
                %v764 = vld [vmem:[%s750 + $0x30] sm:%s741]
                %765 = vst [vmem:[%s751 + $0x30] sm:%s741] %v764
                %v766 = vld [vmem:[%s750 + $0x38] sm:%s741]
                %767 = vst [vmem:[%s751 + $0x38] sm:%s741] %v766
                %v768 = vld [vmem:[%s750 + $0x40] sm:%s741]
                %769 = vst [vmem:[%s751 + $0x40] sm:%s741] %v768
                %v770 = vld [vmem:[%s750 + $0x48] sm:%s741]
                %771 = vst [vmem:[%s751 + $0x48] sm:%s741] %v770
                %v772 = vld [vmem:[%s750 + $0x50] sm:%s741]
                %773 = vst [vmem:[%s751 + $0x50] sm:%s741] %v772
                %v774 = vld [vmem:[%s750 + $0x58] sm:%s741]
                %775 = vst [vmem:[%s751 + $0x58] sm:%s741] %v774
                %v776 = vld [vmem:[%s750 + $0x60] sm:%s741]
                %777 = vst [vmem:[%s751 + $0x60] sm:%s741] %v776
                %v778 = vld [vmem:[%s750 + $0x68] sm:%s741]
                %779 = vst [vmem:[%s751 + $0x68] sm:%s741] %v778
                %v780 = vld [vmem:[%s750 + $0x70] sm:%s741]
                %781 = vst [vmem:[%s751 + $0x70] sm:%s741] %v780
                %v782 = vld [vmem:[%s750 + $0x78] sm:%s741]
                %783 = vst [vmem:[%s751 + $0x78] sm:%s741] %v782
                %s784 = sadd.s32 1, %s749
                %p785 = scmp.ge.s32.totalorder %s784, %s742
                %s786 = scalar_select %p785, 0, %s784
                %s787 = smul.u32 %s786, 128
                %s788 = smul.u32 %s786, 128
                %s789 = scalar_lea.vmem %s717, %s787 [#allocation2]
                %s790 = scalar_lea.vmem %s732, %s788
              $region69: #{tpu_custom_call.1} parent=63 // loop_footer
                %s746 = sadd.s32 %s744, 1
              $region70: #{tpu_custom_call.1} parent=63 // loop_footer_branch
                %743 = sbr.rel target = $region66
              $region71: #{tpu_custom_call.1} parent=63 // loop_exit
                _
              %s791 = sshrl.u32 %s728, 4
              %s792 = sand.u32 %s728, 15
              %s793 = smul.u32 %s791, 16
              %s794 = smul.u32 8, %s793
              %s795 = scalar_lea.vmem %s717, %s794 [#allocation2]
              %s796 = smul.u32 8, %s793
              %s797 = scalar_lea.vmem %s732, %s796
              // While loop
              $region72: #{tpu_custom_call.1} parent=63 // loop_pre_header
                _
              $region73: #{tpu_custom_call.1} parent=63 // loop_header
                %s799 = sphi 0, %s801
                %p800 = scmp.ge.s32.totalorder %s799, %s792
                %s804 = sphi 0, %s811
                %s805 = sphi %s795, %s814
                %s806 = sphi %s797, %s815
              $region74: #{tpu_custom_call.1} parent=63 // loop_header_branch
                %803 = sbr.rel (%p800) target = $region78
              $region75: #{tpu_custom_call.1} parent=63 // loop_body
                %v807 = vld [vmem:[%s805] sm:%s741]
                %808 = vst [vmem:[%s806] sm:%s741] %v807
                %s809 = sadd.s32 1, %s804
                %p810 = scmp.ge.s32.totalorder %s809, %s792
                %s811 = scalar_select %p810, 0, %s809
                %s812 = smul.u32 %s811, 8
                %s813 = smul.u32 %s811, 8
                %s814 = scalar_lea.vmem %s795, %s812 [#allocation2]
                %s815 = scalar_lea.vmem %s797, %s813
              $region76: #{tpu_custom_call.1} parent=63 // loop_footer
                %s801 = sadd.s32 %s799, 1
              $region77: #{tpu_custom_call.1} parent=63 // loop_footer_branch
                %798 = sbr.rel target = $region73
              $region78: #{tpu_custom_call.1} parent=63 // loop_exit
                _
            $region64: #{tpu_custom_call.1} parent=55 // pred_fallthru
              _
          $region56: #{tpu_custom_call.1} parent=51 // pred_fallthru
            _
          %894 = vnop
        $region52: #{tpu_custom_call.1} parent=47 // pred_fallthru
          _
        // Predicated region
        $region101: #{tpu_custom_call.1} parent=47 // pred_check
          %p895 = pneg %p219
        $region102: #{tpu_custom_call.1} parent=47 // pred_check_branch
          %897 = sbr.rel (%p895) target = $region104
        $region103: #{tpu_custom_call.1} parent=47 // pred_region
          %s899 = ssub.s32 16, 16
          %900 = vsyncadd %s719, %s899
          %s901 = smul.addr %s23, 16
          %s902 = scalar_lea.hbm %s8, %s901
          %s904 = sshll.u32 %s721, 4
          %s905 = int_to_ptr.vmem [resolvable:$true] %s904
          %907 = dma.vmem_to_hbm [thread:$0]  %s905, 16, %s902, %s719
        $region104: #{tpu_custom_call.1} parent=47 // pred_fallthru
          _
      $region48: #{tpu_custom_call.1} parent=5 // pred_fallthru
        _
      %p908 = scmp.le.s32.totalorder 2, %s18
      // Predicated region
      $region105: #{tpu_custom_call.1} parent=5 // pred_check
        %p909 = pneg %p908
      $region106: #{tpu_custom_call.1} parent=5 // pred_check_branch
        %911 = sbr.rel (%p909) target = $region108
      $region107: #{tpu_custom_call.1} parent=5 // pred_region
        %s912 = ssub.s32 %s18, 2
        // Predicated region
        $region109: #{tpu_custom_call.1} parent=107 // pred_check
          %p913 = pneg %p199
        $region110: #{tpu_custom_call.1} parent=107 // pred_check_branch
          %915 = sbr.rel (%p913) target = $region112
        $region111: #{tpu_custom_call.1} parent=107 // pred_region
          %s916 = sand.u32 %s184, 1
          %s917 = sand.u32 %s184, 1
          %s918 = smul.addr %s917, 128
          %s919 = scalar_lea.vmem [#allocation2], %s918
        $region112: #{tpu_custom_call.1} parent=107 // pred_fallthru
          _
        // Predicated region
        $region113: #{tpu_custom_call.1} parent=107 // pred_check
          %p920 = pneg %p225
        $region114: #{tpu_custom_call.1} parent=107 // pred_check_branch
          %922 = sbr.rel (%p920) target = $region116
        $region115: #{tpu_custom_call.1} parent=107 // pred_region
          %s923 = sand.u32 %s210, 1
          %s924 = scalar_lea.sflag [#allocation4], %s923
          %s925 = sand.u32 %s210, 1
          %s926 = scalar_lea.vmem [#allocation3], %s925
          %927 = dma.done %s924, 16
        $region116: #{tpu_custom_call.1} parent=107 // pred_fallthru
          _
      $region108: #{tpu_custom_call.1} parent=5 // pred_fallthru
        _
    $region6: #{tpu_custom_call.1} parent=1 // loop_footer
      %s22 = sadd.s32 1, %s18
    $region7: #{tpu_custom_call.1} parent=1 // loop_footer_branch
      %17 = sbr.rel target = $region3
    $region8: #{tpu_custom_call.1} parent=1 // loop_exit
      _
    %928 = vsyncpa [#allocation4], 1
    %s929 = scalar_lea.sflag [#allocation4], 1
    %930 = vsyncpa %s929, 1

</llo_original>
